<compile_context>
chip_gen: v7x
topology: tpu7x:2x2x1
jax: 0.10.0
libtpu: 0.0.40
codegen_flags: <defaults>
</compile_context>

<pallas_src>
import functools

import jax
import jax.numpy as jnp
from jax.experimental import pallas as pl
from jax.experimental.pallas import tpu as pltpu

Q = 0.7             # loss exponent q
K = 0.5             # truncation threshold k
TRAINSET_SIZE = 64  # small synthetic trainset (PyTorch default is 50000)

_VMEM_TILE_BUDGET = 8 * 1024 * 1024   # per logits buffer (x2 double-buffered)


def _make_kernel(inv_n):
    """Build the kernel with the (static) 1/B mean factor baked in."""
    k_pow_q = K ** Q
    inv_q = 1.0 / Q

    def kernel(logits_ref, targets_ref, w_ref, out_ref, acc_ref):
        i = pl.program_id(0)

        @pl.when(i == 0)
        def _init():
            acc_ref[...] = jnp.zeros_like(acc_ref)

        # --- per-tile work: (TB, C) logits tile ------------------------------
        x = logits_ref[...].astype(jnp.float32)                      # (TB, C)

        # Numerically-stable softmax pieces WITHOUT materializing p.
        m = jnp.max(x, axis=1, keepdims=True)                        # (TB, 1)
        e = jnp.exp(x - m)                                           # (TB, C)
        denom = jnp.sum(e, axis=1, keepdims=True)                    # (TB, 1)

        # Target-class numerator via one-hot mask (TPU-friendly gather).
        col = jax.lax.broadcasted_iota(jnp.int32, x.shape, dimension=1)
        t = targets_ref[...]                                         # (TB, 1)
        num = jnp.sum(jnp.where(col == t, e, 0.0), axis=1, keepdims=True)

        # yg = p[i, t_i]; epsilon clamp keeps yg**q well-defined at underflow.
        yg = jnp.maximum(num * pl.reciprocal(denom, approx=False), 1e-30)

        # loss_i = w_i * (k**q - yg**q) / q   (padded rows have w_i == 0)
        loss = w_ref[...] * ((k_pow_q - yg ** Q) * inv_q)            # (TB, 1)
        acc_ref[...] += jnp.sum(loss, axis=(0, 1), keepdims=True)    # (1, 1)

        @pl.when(i == pl.num_programs(0) - 1)
        def _finalize():
            out_ref[...] = acc_ref[...] * inv_n

    return kernel


def _pick_tile_b(batch, num_classes, itemsize):
    """Largest row tile that keeps the double-buffered logits stream small."""
    tb = _VMEM_TILE_BUDGET // max(1, num_classes * itemsize)
    tb = max(8, min(512, (tb // 8) * 8))
    # Never tile bigger than the (8-rounded) batch itself.
    batch_rounded = ((batch + 7) // 8) * 8
    return min(tb, batch_rounded)


@functools.partial(jax.jit, static_argnames=("tile_b",))
def truncated_loss(logits, targets, indexes, weight, *, tile_b=None):
    """Forward pass of TruncatedLoss. Returns a scalar f32 loss."""
    B, C = logits.shape
    itemsize = jnp.dtype(logits.dtype).itemsize

    if tile_b is None:
        tile_b = _pick_tile_b(B, C, itemsize)
    n_tiles = pl.cdiv(B, tile_b)
    b_pad = n_tiles * tile_b

    # Parameter glue: weight[indexes] row gather done in plain JAX.
    w = weight[indexes].reshape(B, 1).astype(jnp.float32)            # (B, 1)
    t = targets.astype(jnp.int32).reshape(B, 1)                      # (B, 1)

    if b_pad != B:
        pad = b_pad - B
        logits = jnp.pad(logits, ((0, pad), (0, 0)))
        t = jnp.pad(t, ((0, pad), (0, 0)))
        w = jnp.pad(w, ((0, pad), (0, 0)))   # zero weight => zero contribution

    kernel = _make_kernel(inv_n=1.0 / B)

    out = pl.pallas_call(
        kernel,
        out_shape=jax.ShapeDtypeStruct((1, 1), jnp.float32),
        grid_spec=pltpu.PrefetchScalarGridSpec(
            num_scalar_prefetch=0,
            grid=(n_tiles,),
            in_specs=[
                pl.BlockSpec((tile_b, C), lambda i: (i, 0)),
                pl.BlockSpec((tile_b, 1), lambda i: (i, 0)),
                pl.BlockSpec((tile_b, 1), lambda i: (i, 0)),
            ],
            out_specs=pl.BlockSpec((1, 1), lambda i: (0, 0)),
            scratch_shapes=[pltpu.VMEM((1, 1), jnp.float32)],
        ),
        compiler_params=pltpu.CompilerParams(
            dimension_semantics=("arbitrary",),   # batch axis carries the sum
        ),
        cost_estimate=pl.CostEstimate(
            flops=5 * b_pad * C,
            transcendentals=b_pad * C,
            bytes_accessed=b_pad * C * itemsize + 2 * b_pad * 4 + 4,
        ),
    )(logits, t, w)
    return out[0, 0]


def _reference(logits, targets, indexes, weight):
    p = jax.nn.softmax(logits.astype(jnp.float32), axis=1)
    yg = jnp.take_along_axis(p, targets[:, None].astype(jnp.int32), axis=1)
    w = weight[indexes].reshape(-1, 1).astype(jnp.float32)
    loss = (1.0 - yg ** Q) / Q * w - (1.0 - K ** Q) / Q * w
    return jnp.mean(loss)


if __name__ == "__main__":
    key = jax.random.PRNGKey(0)

    # --- main check: small shapes consistent with the module -----------------
    B, C = 8, 16
    k1, k2, k3 = jax.random.split(key, 3)
    logits = jax.random.normal(k1, (B, C), dtype=jnp.float32)
    targets = jax.random.randint(k2, (B,), 0, C, dtype=jnp.int32)
    indexes = jax.random.randint(k3, (B,), 0, TRAINSET_SIZE, dtype=jnp.int32)
    # Deterministic parameter init: weight = ones(trainset_size, 1), as in __init__.
    weight = jnp.ones((TRAINSET_SIZE, 1), dtype=jnp.float32)

    loss = truncated_loss(logits, targets, indexes, weight)
    jax.block_until_ready(loss)
    ref = _reference(logits, targets, indexes, weight)
    assert jnp.allclose(loss, ref, atol=1e-5, rtol=1e-5), (loss, ref)

    # --- second check: multi-tile grid + batch padding path -------------------
    B2, C2 = 20, 32   # 3 tiles of 8 rows, 4 padded rows
    k4, k5, k6 = jax.random.split(jax.random.PRNGKey(1), 3)
    logits2 = jax.random.normal(k4, (B2, C2), dtype=jnp.float32)
    targets2 = jax.random.randint(k5, (B2,), 0, C2, dtype=jnp.int32)
    indexes2 = jax.random.randint(k6, (B2,), 0, TRAINSET_SIZE, dtype=jnp.int32)

    loss2 = truncated_loss(logits2, targets2, indexes2, weight, tile_b=8)
    jax.block_until_ready(loss2)
    ref2 = _reference(logits2, targets2, indexes2, weight)
    assert jnp.allclose(loss2, ref2, atol=1e-5, rtol=1e-5), (loss2, ref2)

    print("KERNEL_OK")
</pallas_src>

<mosaic_0001>
module attributes {stable_mosaic.version = 11 : i64} {
  func.func @kernel(%arg0: i32, %arg1: memref<8x16xf32, #tpu.memory_space<vmem>>, %arg2: memref<8x1xi32, #tpu.memory_space<vmem>>, %arg3: memref<8x1xf32, #tpu.memory_space<vmem>>, %arg4: memref<1x1xf32, #tpu.memory_space<vmem>>, %arg5: memref<1x1xf32, #tpu.memory_space<vmem>>) attributes {dimension_semantics = [#tpu.dimension_semantics<arbitrary>], iteration_bounds = array<i64: 1>, scalar_prefetch = 0 : i64, scratch_operands = 1 : i64, tpu.core_type = #tpu.core_type<tc>, window_params = [{transform_indices = @transform_0, window_bounds = array<i64: 8, 16>}, {transform_indices = @transform_1, window_bounds = array<i64: 8, 1>}, {transform_indices = @transform_2, window_bounds = array<i64: 8, 1>}, {pipeline_mode = #tpu.pipeline_mode<synchronous>, transform_indices = @transform_3, window_bounds = array<i64: 1, 1>}]} {
    %c0_i32 = arith.constant 0 : i32
    %0 = arith.cmpi eq, %arg0, %c0_i32 : i32
    %1 = arith.extui %0 : i1 to i32
    %c0_i32_0 = arith.constant 0 : i32
    %2 = arith.cmpi ne, %1, %c0_i32_0 : i32
    scf.if %2 {
      %cst_20 = arith.constant 0.000000e+00 : f32
      %42 = vector.broadcast %cst_20 : f32 to vector<1x1xf32>
      %c0_21 = arith.constant 0 : index
      %c0_22 = arith.constant 0 : index
      %43 = vector.load %arg5[%c0_21, %c0_22] : memref<1x1xf32, #tpu.memory_space<vmem>>, vector<1x1xf32>
      tpu.vector_store %arg5[%c0_21, %c0_22], %42 {strides = array<i32>} : memref<1x1xf32, #tpu.memory_space<vmem>>, vector<1x1xf32>,
    } else {
    }
    %c0 = arith.constant 0 : index
    %c0_1 = arith.constant 0 : index
    %3 = vector.load %arg1[%c0, %c0_1] : memref<8x16xf32, #tpu.memory_space<vmem>>, vector<8x16xf32>
    %cst = arith.constant dense<0xFF800000> : vector<8xf32>
    %4 = vector.multi_reduction <maximumf>, %3, %cst [1] : vector<8x16xf32> to vector<8xf32>
    %5 = vector.shape_cast %4 : vector<8xf32> to vector<8x1xf32>
    %6 = vector.broadcast %5 : vector<8x1xf32> to vector<8x16xf32>
    %7 = arith.subf %3, %6 : vector<8x16xf32>
    %8 = math.exp %7 : vector<8x16xf32>
    %cst_2 = arith.constant dense<0.000000e+00> : vector<8xf32>
    %9 = vector.multi_reduction <add>, %8, %cst_2 [1] : vector<8x16xf32> to vector<8xf32>
    %10 = vector.shape_cast %9 : vector<8xf32> to vector<8x1xf32>
    %11 = tpu.iota {dimensions = array<i32: 1>} : vector<8x16xi32>
    %c0_3 = arith.constant 0 : index
    %c0_4 = arith.constant 0 : index
    %12 = vector.load %arg2[%c0_3, %c0_4] : memref<8x1xi32, #tpu.memory_space<vmem>>, vector<8x1xi32>
    %13 = vector.broadcast %12 : vector<8x1xi32> to vector<8x16xi32>
    %14 = arith.cmpi eq, %11, %13 : vector<8x16xi32>
    %cst_5 = arith.constant 0.000000e+00 : f32
    %15 = vector.broadcast %cst_5 : f32 to vector<8x16xf32>
    %16 = arith.select %14, %8, %15 : vector<8x16xi1>, vector<8x16xf32>
    %cst_6 = arith.constant dense<0.000000e+00> : vector<8xf32>
    %17 = vector.multi_reduction <add>, %16, %cst_6 [1] : vector<8x16xf32> to vector<8xf32>
    %18 = vector.shape_cast %17 : vector<8xf32> to vector<8x1xf32>
    %19 = tpu.reciprocal %10 : vector<8x1xf32> -> vector<8x1xf32>
    %20 = arith.mulf %18, %19 : vector<8x1xf32>
    %cst_7 = arith.constant 1.000000e-30 : f32
    %21 = vector.broadcast %cst_7 : f32 to vector<8x1xf32>
    %22 = arith.maximumf %20, %21 : vector<8x1xf32>
    %c0_8 = arith.constant 0 : index
    %c0_9 = arith.constant 0 : index
    %23 = vector.load %arg3[%c0_8, %c0_9] : memref<8x1xf32, #tpu.memory_space<vmem>>, vector<8x1xf32>
    %cst_10 = arith.constant 0.699999988 : f32
    %24 = vector.broadcast %cst_10 : f32 to vector<8x1xf32>
    %25 = math.powf %22, %24 : vector<8x1xf32>
    %cst_11 = arith.constant 0.615572214 : f32
    %26 = vector.broadcast %cst_11 : f32 to vector<8x1xf32>
    %27 = arith.subf %26, %25 : vector<8x1xf32>
    %cst_12 = arith.constant 1.42857146 : f32
    %28 = vector.broadcast %cst_12 : f32 to vector<8x1xf32>
    %29 = arith.mulf %27, %28 : vector<8x1xf32>
    %30 = arith.mulf %23, %29 : vector<8x1xf32>
    %c0_13 = arith.constant 0 : index
    %c0_14 = arith.constant 0 : index
    %31 = vector.load %arg5[%c0_13, %c0_14] : memref<1x1xf32, #tpu.memory_space<vmem>>, vector<1x1xf32>
    %32 = vector.shape_cast %30 : vector<8x1xf32> to vector<1x8x1xf32>
    %cst_15 = arith.constant dense<0.000000e+00> : vector<1xf32>
    %33 = vector.multi_reduction <add>, %32, %cst_15 [1, 2] : vector<1x8x1xf32> to vector<1xf32>
    %34 = vector.shape_cast %33 : vector<1xf32> to vector<1x1x1xf32>
    %35 = vector.extract %34[0, 0, 0] : f32 from vector<1x1x1xf32>
    %36 = vector.broadcast %35 : f32 to vector<1x1xf32>
    %37 = arith.addf %31, %36 : vector<1x1xf32>
    %c0_16 = arith.constant 0 : index
    %c0_17 = arith.constant 0 : index
    %38 = vector.load %arg5[%c0_16, %c0_17] : memref<1x1xf32, #tpu.memory_space<vmem>>, vector<1x1xf32>
    tpu.vector_store %arg5[%c0_16, %c0_17], %37 {strides = array<i32>} : memref<1x1xf32, #tpu.memory_space<vmem>>, vector<1x1xf32>,
    %c0_i32_18 = arith.constant 0 : i32
    %39 = arith.cmpi eq, %arg0, %c0_i32_18 : i32
    %40 = arith.extui %39 : i1 to i32
    %c0_i32_19 = arith.constant 0 : i32
    %41 = arith.cmpi ne, %40, %c0_i32_19 : i32
    scf.if %41 {
      %c0_20 = arith.constant 0 : index
      %c0_21 = arith.constant 0 : index
      %42 = vector.load %arg5[%c0_20, %c0_21] : memref<1x1xf32, #tpu.memory_space<vmem>>, vector<1x1xf32>
      %cst_22 = arith.constant 1.250000e-01 : f32
      %43 = vector.broadcast %cst_22 : f32 to vector<1x1xf32>
      %44 = arith.mulf %42, %43 : vector<1x1xf32>
      %c0_23 = arith.constant 0 : index
      %c0_24 = arith.constant 0 : index
      %45 = vector.load %arg4[%c0_23, %c0_24] : memref<1x1xf32, #tpu.memory_space<vmem>>, vector<1x1xf32>
      tpu.vector_store %arg4[%c0_23, %c0_24], %44 {strides = array<i32>} : memref<1x1xf32, #tpu.memory_space<vmem>>, vector<1x1xf32>,
    } else {
    }
    return
  }
  func.func @transform_0(%arg0: i32) -> (i32, i32) {
    %c0_i32 = arith.constant 0 : i32
    %c0_i32_0 = arith.constant 0 : i32
    return %arg0, %c0_i32 : i32, i32
  }
  func.func @transform_1(%arg0: i32) -> (i32, i32) {
    %c0_i32 = arith.constant 0 : i32
    %c0_i32_0 = arith.constant 0 : i32
    return %arg0, %c0_i32 : i32, i32
  }
  func.func @transform_2(%arg0: i32) -> (i32, i32) {
    %c0_i32 = arith.constant 0 : i32
    %c0_i32_0 = arith.constant 0 : i32
    return %arg0, %c0_i32 : i32, i32
  }
  func.func @transform_3(%arg0: i32) -> (i32, i32) {
    %c0_i32 = arith.constant 0 : i32
    %c0_i32_0 = arith.constant 0 : i32
    %c0_i32_1 = arith.constant 0 : i32
    return %c0_i32, %c0_i32_0 : i32, i32
  }
}

</mosaic_0001>

<llo_original>
// kernel: truncated_loss.1
$region0: #{truncated_loss.1}
  #allocation0 [shape = 'u32[]', space=smem, size = 0x4, offset = 0x4, fixed_abs, tag = 'smem constant byte address 0x4 - core index']
  #allocation1 [shape = 'u32[144,128]{1,0:T(1,128)}', space=vmem, size = 0x12000, scoped, tag = 'internal scratch']
  #allocation2 [shape = 'f32[1,1]{1,0:T(1,128)}', space=vmem, size = 0x200, scoped, tag = 'scratch operand']
  %s0 = inlined_call_operand.vmem [shape: f32[8,16], index: 0, kind: input, shape index: {}]
  %s1 = inlined_call_operand.vmem [shape: s32[8,1], index: 1, kind: input, shape index: {}]
  %s2 = inlined_call_operand.vmem [shape: f32[8,1], index: 2, kind: input, shape index: {}]
  %s3 = inlined_call_operand.hbm [shape: f32[1,1], index: 3, kind: output, shape index: {}]
  %s4 = sld [smem:[#allocation0]]
  $region30: #{truncated_loss.1} parent=0
    _
  %s6 = ssub.s32 1, %s4
  %s7 = scalar_select 0, %s6, %s4
  $region1: #{truncated_loss.1} parent=0
    #allocation3 [shape = 'u8[512]{0}', space=vmem, size = 0x400, scoped, tag = 'output window, operand 0, single buffered']
    #allocation4 [shape = 's32[1]{0}', space=sflag, size = 0x4, scoped, tag = 'scoped memory for truncated_loss.1']
    %8 = vsyncpa [#allocation4], 0
    // Predicated region
    $region2: #{truncated_loss.1} parent=1 // pred_check
      _
    $region3: #{truncated_loss.1} parent=1 // pred_check_branch
      %10 = sbr.rel (0) target = $region5
    $region4: #{truncated_loss.1} parent=1 // pred_region
      _
    $region5: #{truncated_loss.1} parent=1 // pred_fallthru
      _
    // Predicated region
    $region6: #{truncated_loss.1} parent=1 // pred_check
      _
    $region7: #{truncated_loss.1} parent=1 // pred_check_branch
      %12 = sbr.rel (0) target = $region9
    $region8: #{truncated_loss.1} parent=1 // pred_region
      _
    $region9: #{truncated_loss.1} parent=1 // pred_fallthru
      _
    // Predicated region
    $region10: #{truncated_loss.1} parent=1 // pred_check
      _
    $region11: #{truncated_loss.1} parent=1 // pred_check_branch
      %14 = sbr.rel (0) target = $region13
    $region12: #{truncated_loss.1} parent=1 // pred_region
      _
    $region13: #{truncated_loss.1} parent=1 // pred_fallthru
      _
    %p15 = scmp.eq.s32.totalorder 0, 0
    // Predicated region
    $region14: #{truncated_loss.1} parent=1 // pred_check
      %p16 = pneg %p15
    $region15: #{truncated_loss.1} parent=1 // pred_check_branch
      %18 = sbr.rel (%p16) target = $region17
    $region16: #{truncated_loss.1} parent=1 // pred_region
      %vm19 = vcmask 0
      %20 = vst.msk [vmem:[#allocation2] sm:$0x1] %vm19, 0.0
    $region17: #{truncated_loss.1} parent=1 // pred_fallthru
      _
    %v21 = vld [vmem:[%s0] sm:$0xff]
    %vm22 = vcmask 130048
    %v23 = vsel %vm22, %v21, -inf
    %24 = vmax.xlane.f32.xlu0 %v23
    %v25 = vpop.xlane.xlu0 %24
    %v26 = vsub.f32 %v21, %v25
    %v27 = vmul.f32 %v26, 1.442695
    %v28 = vpow.pop %v27
    %v29 = vsel %vm22, %v28, 0.0
    %30 = vadd.xlane.f32.xlu0 %v29
    %v31 = vpop.xlane.xlu0 %30
    %v32 = vlaneseq
    %v33 = vand.u32 %v32, 127
    %v34 = vld [vmem:[%s1] sm:$0xff]
    %35 = vset.pattern.permute.xlu0 0
    %36 = vperm.xlu0 %35, %v34
    %v37 = vpop.permute.xlu0 %36
    %vm38 = vcmp.eq.s32.totalorder %v33, %v37
    %v39 = vsel %vm38, %v28, 0.0
    %v40 = vsel %vm22, %v39, 0.0
    %41 = vadd.xlane.f32.xlu0 %v40
    %v42 = vpop.xlane.xlu0 %41
    %v43 = vrcp.pop %v31
    %v44 = vmul.f32 %v42, %v43
    %v45 = vmax.f32 %v44, 1e-30
    %v46 = vld [vmem:[%s2] sm:$0xff]
    %v47 = vpow.f32 %v45, 0.7
    %v48 = vsub.f32 0.6155722, %v47
    %v49 = vmul.f32 %v48, 1.4285715
    %v50 = vmul.f32 %v46, %v49
    %v51 = vld [vmem:[#allocation2] sm:$0x1]
    %vm52 = vcmask 7168
    %v53 = vsel %vm52, %v50, 0.0
    %54 = vadd.xlane.f32.xlu0 %v53
    %v55 = vpop.xlane.xlu0 %54
    %v56 = vrot.slane %v55, 4
    %v57 = vadd.f32 %v55, %v56
    %v58 = vrot.slane %v57, 2
    %v59 = vadd.f32 %v57, %v58
    %v60 = vrot.slane %v59, 1
    %v61 = vadd.f32 %v59, %v60
    %s62 = vtos %v61
    %v63 = vstv %s62
    %v64 = vadd.f32 %v51, %v63
    %vm65 = vcmask 0
    %66 = vst.msk [vmem:[#allocation2] sm:$0x1] %vm65, %v64
    // Predicated region
    $region18: #{truncated_loss.1} parent=1 // pred_check
      %p67 = pneg %p15
    $region19: #{truncated_loss.1} parent=1 // pred_check_branch
      %69 = sbr.rel (%p67) target = $region21
    $region20: #{truncated_loss.1} parent=1 // pred_region
      %v70 = vld [vmem:[#allocation2] sm:$0x1]
      %v71 = vmul.f32 %v70, 0.125
      %72 = vst.msk [vmem:[#allocation3] sm:$0x1] %vm65, %v71
    $region21: #{truncated_loss.1} parent=1 // pred_fallthru
      _
    // Predicated region
    $region22: #{truncated_loss.1} parent=1 // pred_check
      _
    $region23: #{truncated_loss.1} parent=1 // pred_check_branch
      %74 = sbr.rel (0) target = $region25
    $region24: #{truncated_loss.1} parent=1 // pred_region
      %s76 = ssub.s32 16, 16
      %77 = vsyncadd [#allocation4], %s76
      %s79 = sshll.u32 [#allocation3], 4
      %s80 = int_to_ptr.vmem [resolvable:$true] %s79
      %82 = dma.vmem_to_hbm [thread:$0]  %s80, 16, %s3, [#allocation4]
    $region25: #{truncated_loss.1} parent=1 // pred_fallthru
      _
    // Predicated region
    $region26: #{truncated_loss.1} parent=1 // pred_check
      _
    $region27: #{truncated_loss.1} parent=1 // pred_check_branch
      %84 = sbr.rel (0) target = $region29
    $region28: #{truncated_loss.1} parent=1 // pred_region
      %85 = dma.done [#allocation4], 16
    $region29: #{truncated_loss.1} parent=1 // pred_fallthru
      _
    %86 = vsyncpa [#allocation4], 1

</llo_original>
